<compile_context>
chip_gen: v5e
topology: v5e:2x2
jax: 0.10.0
libtpu: 0.0.40
codegen_flags: <defaults>
</compile_context>

<pallas_src>
import functools

import jax
import jax.numpy as jnp
from jax.experimental import pallas as pl
from jax.experimental.pallas import tpu as pltpu


def _round_up(n, m):
    return (n + m - 1) // m * m


def _ffn_kernel(x_ref, w1_ref, b1_ref, w2_ref, b2_ref, g_ref, beta_ref,
                o_ref, *, eps):
    """One row tile of: LayerNorm(x + (relu(x @ W1 + b1) @ W2 + b2))."""
    x = x_ref[...]

    # conv1 (1x1) == per-token matmul; native-dtype MXU inputs, f32 accumulate.
    h = jnp.dot(x, w1_ref[...], preferred_element_type=jnp.float32)
    h = jnp.maximum(h + b1_ref[...].astype(jnp.float32), 0.0)

    # conv2 (1x1): back to d_model.  For bf16 inputs relu(h) is intentionally
    # downcast to bf16 before hitting the MXU (bf16 inference; tiny accuracy
    # delta vs an all-f32 reference).
    y = jnp.dot(h.astype(x_ref.dtype), w2_ref[...],
                preferred_element_type=jnp.float32)

    # TODO(synk): dropout omitted (inference mode -> identity).

    # Residual + output bias in f32.
    z = x.astype(jnp.float32) + y + b2_ref[...].astype(jnp.float32)

    # LayerNorm over d_model.  The block's last dim is exactly d_model (the
    # channel axis is never lane-padded), so no masking is needed.
    inv_d = 1.0 / z.shape[-1]
    mean = jnp.sum(z, axis=-1, keepdims=True) * inv_d
    zc = z - mean
    var = jnp.sum(zc * zc, axis=-1, keepdims=True) * inv_d
    out = (zc * jax.lax.rsqrt(var + eps)) * g_ref[...].astype(jnp.float32) \
        + beta_ref[...].astype(jnp.float32)

    o_ref[...] = out.astype(o_ref.dtype)


def prepare_ffn_params(w1, b1, w2, b2, gamma, beta):
    """Pad / reshape FFN parameters once, at parameter-setup time.

    w1: (d_model, d_ff), w2: (d_ff, d_model); b1/b2/gamma/beta are 1-D.
    d_ff is zero-padded to a multiple of 128 so both matmuls see lane-dense
    MXU operands; padded d_ff lanes stay exactly zero through relu and W2.
    The d_model axis is NOT padded.
    (Conv1d(k=1) weights are (out_ch, in_ch, 1) in PyTorch; pass them here
    already transposed to (in_ch, out_ch) matmul layout.)
    """
    d_model, d_ff = w1.shape
    dff_p = _round_up(d_ff, 128)
    w1p = jnp.pad(w1, ((0, 0), (0, dff_p - d_ff)))
    w2p = jnp.pad(w2, ((0, dff_p - d_ff), (0, 0)))
    b1p = jnp.pad(b1, (0, dff_p - d_ff)).reshape(1, dff_p)
    b2p = b2.reshape(1, d_model)
    gp = gamma.reshape(1, d_model)
    btp = beta.reshape(1, d_model)
    return (w1p, b1p, w2p, b2p, gp, btp)


def poswise_feed_forward(x, params, *, eps=1e-6, tm=1024):
    """Position-wise FFN + residual + LayerNorm (PoswiseFeedForwardNet.forward).

    x: (B, L, d_model); `params` comes from prepare_ffn_params().
    eps defaults to 1e-6 (this repo's custom LayerNormalization); pass
    eps=1e-5 to match torch.nn.LayerNorm defaults instead.
    """
    w1p, b1p, w2p, b2p, gp, btp = params
    B, L, d_model = x.shape
    dff_p = w1p.shape[1]
    rows = B * L

    itemsize = jnp.dtype(x.dtype).itemsize
    w_itemsize = jnp.dtype(w1p.dtype).itemsize
    # Sublane packing: 8 f32 rows / 16 bf16 rows per native tile.
    row_align = max(8, 8 * (4 // max(1, itemsize)))

    # Row tile: large (amortizes the ~0.35us per-grid-step overhead), aligned,
    # no bigger than the row count, and capped so the row grid keeps >= 2
    # steps (both v7x TensorCores get work; no-op on v5e/v6e).
    tm_eff = min(tm, _round_up(rows, row_align))
    if rows > row_align:
        tm_eff = min(tm_eff, _round_up(pl.cdiv(rows, 2), row_align))
    tm_eff = max(row_align, _round_up(tm_eff, row_align))

    def footprint(tile_m):
        return (2 * 2 * tile_m * d_model * itemsize                    # x/out dbl buffers
                + 2 * 2 * d_model * dff_p * w_itemsize                 # W1 + W2
                + 2 * (dff_p + 3 * d_model) * w_itemsize               # b1,b2,gamma,beta
                + tile_m * dff_p * 4                                   # h (f32)
                + 3 * tile_m * d_model * 4)                            # z/zc/out f32 temps

    try:
        vmem_cap = int(pltpu.get_tpu_info().vmem_capacity_bytes)
    except Exception:  # narrow hardware query only; never hides kernel errors
        vmem_cap = 64 * 1024 * 1024  # conservative (v7x per-TC VMEM)
    # Shrink the tile if a huge d_ff would not fit (mainly a v7x concern).
    while footprint(tm_eff) > vmem_cap * 85 // 100 and tm_eff > row_align:
        tm_eff = max(row_align, _round_up(tm_eff // 2, row_align))
    vmem_limit = int(min(max(footprint(tm_eff) * 3 // 2, 4 << 20),
                         vmem_cap * 85 // 100))

    grid_m = pl.cdiv(rows, tm_eff)
    x2d = x.reshape(rows, d_model)          # free reshape: no copy, no row pad

    flops = int(4 * rows * d_model * dff_p)  # two matmuls
    bytes_accessed = int(2 * rows * d_model * itemsize
                         + 2 * d_model * dff_p * w_itemsize)

    def const_spec(shape):
        # Grid-invariant operand: constant index_map, never re-DMA'd.
        return pl.BlockSpec(shape, lambda i: (0, 0))

    out2d = pl.pallas_call(
        functools.partial(_ffn_kernel, eps=eps),
        out_shape=jax.ShapeDtypeStruct((rows, d_model), x.dtype),
        grid_spec=pltpu.PrefetchScalarGridSpec(
            num_scalar_prefetch=0,
            grid=(grid_m,),
            in_specs=[
                pl.BlockSpec((tm_eff, d_model), lambda i: (i, 0)),  # x tile
                const_spec((d_model, dff_p)),                       # W1
                const_spec((1, dff_p)),                             # b1
                const_spec((dff_p, d_model)),                       # W2
                const_spec((1, d_model)),                           # b2
                const_spec((1, d_model)),                           # gamma
                const_spec((1, d_model)),                           # beta
            ],
            out_specs=pl.BlockSpec((tm_eff, d_model), lambda i: (i, 0)),
        ),
        compiler_params=pltpu.CompilerParams(
            dimension_semantics=("parallel",),
            vmem_limit_bytes=vmem_limit,
        ),
        cost_estimate=pl.CostEstimate(
            flops=flops, transcendentals=rows, bytes_accessed=bytes_accessed),
    )(x2d, w1p, b1p, w2p, b2p, gp, btp)

    return out2d.reshape(B, L, d_model)


def _reference(x, w1, b1, w2, b2, gamma, beta, eps=1e-6):
    h = jnp.maximum(jnp.einsum("bld,df->blf", x, w1) + b1, 0.0)
    y = jnp.einsum("blf,fd->bld", h, w2) + b2
    z = x + y
    mean = jnp.mean(z, axis=-1, keepdims=True)
    var = jnp.mean((z - mean) ** 2, axis=-1, keepdims=True)
    return gamma * (z - mean) * jax.lax.rsqrt(var + eps) + beta


if __name__ == "__main__":
    key = jax.random.PRNGKey(0)
    kx1, kx2, kx3, kp1, kp2, kp3 = jax.random.split(key, 6)

    def make_params(k, d_model, d_ff):
        k1, kb1, k2, kb2 = jax.random.split(k, 4)
        w1 = jax.random.normal(k1, (d_model, d_ff), jnp.float32) * 0.05
        b1 = jax.random.normal(kb1, (d_ff,), jnp.float32) * 0.05
        w2 = jax.random.normal(k2, (d_ff, d_model), jnp.float32) * 0.05
        b2 = jax.random.normal(kb2, (d_model,), jnp.float32) * 0.05
        gamma = jnp.ones((d_model,), jnp.float32)
        beta = jnp.zeros((d_model,), jnp.float32)
        return (w1, b1, w2, b2, gamma, beta)

    # Case 1: d_model < 128 (no lane padding, masked stores) and B*L not a
    # tile multiple -> exercises the partial-trailing-block path.
    B, L, d_model, d_ff = 2, 7, 32, 128
    x1 = jax.random.normal(kx1, (B, L, d_model), jnp.float32)
    raw1 = make_params(kp1, d_model, d_ff)
    out1 = jax.block_until_ready(
        poswise_feed_forward(x1, prepare_ffn_params(*raw1)))
    ref1 = _reference(x1, *raw1)
    assert out1.shape == (B, L, d_model)
    assert jnp.allclose(out1, ref1, atol=1e-4, rtol=1e-4), "case1 mismatch"

    # Case 2: lane-aligned d_model=128 (co_attention's actual config), f32.
    B, L, d_model, d_ff = 2, 8, 128, 128
    x2 = jax.random.normal(kx2, (B, L, d_model), jnp.float32)
    raw2 = make_params(kp2, d_model, d_ff)
    p2 = prepare_ffn_params(*raw2)
    out2 = jax.block_until_ready(poswise_feed_forward(x2, p2))
    ref2 = _reference(x2, *raw2)
    assert jnp.allclose(out2, ref2, atol=1e-4, rtol=1e-4), "case2 mismatch"

    # Case 3: bf16 activations/weights go straight to the MXU (no f32 upcast).
    xb = x2.astype(jnp.bfloat16)
    rawb = tuple(p.astype(jnp.bfloat16) for p in raw2)
    outb = jax.block_until_ready(
        poswise_feed_forward(xb, prepare_ffn_params(*rawb)))
    refb = _reference(xb.astype(jnp.float32),
                      *(p.astype(jnp.float32) for p in rawb))
    assert outb.dtype == jnp.bfloat16
    assert jnp.allclose(outb.astype(jnp.float32), refb,
                        atol=1e-1, rtol=1e-1), "bf16 mismatch"

    # Case 4: multi-step grid with a ragged last tile and d_model not a lane
    # multiple (96) -> exercises tm capping + partial block + masked stores.
    B, L, d_model, d_ff = 3, 200, 96, 128
    x3 = jax.random.normal(kx3, (B, L, d_model), jnp.float32)
    raw3 = make_params(kp3, d_model, d_ff)
    out3 = jax.block_until_ready(
        poswise_feed_forward(x3, prepare_ffn_params(*raw3)))
    ref3 = _reference(x3, *raw3)
    assert jnp.allclose(out3, ref3, atol=1e-4, rtol=1e-4), "case4 mismatch"

    print("KERNEL_OK")
</pallas_src>

<mosaic_0001>
module attributes {stable_mosaic.version = 11 : i64} {
  func.func @_ffn_kernel(%arg0: i32, %arg1: memref<8x32xf32, #tpu.memory_space<vmem>>, %arg2: memref<32x128xf32, #tpu.memory_space<vmem>>, %arg3: memref<1x128xf32, #tpu.memory_space<vmem>>, %arg4: memref<128x32xf32, #tpu.memory_space<vmem>>, %arg5: memref<1x32xf32, #tpu.memory_space<vmem>>, %arg6: memref<1x32xf32, #tpu.memory_space<vmem>>, %arg7: memref<1x32xf32, #tpu.memory_space<vmem>>, %arg8: memref<8x32xf32, #tpu.memory_space<vmem>>) attributes {dimension_semantics = [#tpu.dimension_semantics<parallel>], iteration_bounds = array<i64: 2>, scalar_prefetch = 0 : i64, scratch_operands = 0 : i64, tpu.core_type = #tpu.core_type<tc>, window_params = [{transform_indices = @transform_0, window_bounds = array<i64: 8, 32>}, {pipeline_mode = #tpu.pipeline_mode<synchronous>, transform_indices = @transform_1, window_bounds = array<i64: 32, 128>}, {pipeline_mode = #tpu.pipeline_mode<synchronous>, transform_indices = @transform_2, window_bounds = array<i64: 1, 128>}, {pipeline_mode = #tpu.pipeline_mode<synchronous>, transform_indices = @transform_3, window_bounds = array<i64: 128, 32>}, {pipeline_mode = #tpu.pipeline_mode<synchronous>, transform_indices = @transform_4, window_bounds = array<i64: 1, 32>}, {pipeline_mode = #tpu.pipeline_mode<synchronous>, transform_indices = @transform_5, window_bounds = array<i64: 1, 32>}, {pipeline_mode = #tpu.pipeline_mode<synchronous>, transform_indices = @transform_6, window_bounds = array<i64: 1, 32>}, {transform_indices = @transform_7, window_bounds = array<i64: 8, 32>}]} {
    %c0 = arith.constant 0 : index
    %c0_0 = arith.constant 0 : index
    %0 = vector.load %arg1[%c0, %c0_0] : memref<8x32xf32, #tpu.memory_space<vmem>>, vector<8x32xf32>
    %c0_1 = arith.constant 0 : index
    %c0_2 = arith.constant 0 : index
    %1 = vector.load %arg2[%c0_1, %c0_2] : memref<32x128xf32, #tpu.memory_space<vmem>>, vector<32x128xf32>
    %cst = arith.constant dense<0.000000e+00> : vector<8x128xf32>
    %2 = tpu.matmul %0, %1, %cst {dimension_numbers = #tpu.dot_dimension_numbers<[1], [0], [0], [1], [0, 0, 1, 1], [], []>} : vector<8x32xf32>, vector<32x128xf32>, vector<8x128xf32> -> vector<8x128xf32>
    %c0_3 = arith.constant 0 : index
    %c0_4 = arith.constant 0 : index
    %3 = vector.load %arg3[%c0_3, %c0_4] : memref<1x128xf32, #tpu.memory_space<vmem>>, vector<1x128xf32>
    %4 = vector.broadcast %3 : vector<1x128xf32> to vector<8x128xf32>
    %5 = arith.addf %2, %4 : vector<8x128xf32>
    %cst_5 = arith.constant 0.000000e+00 : f32
    %6 = vector.broadcast %cst_5 : f32 to vector<8x128xf32>
    %7 = arith.maximumf %5, %6 : vector<8x128xf32>
    %c0_6 = arith.constant 0 : index
    %c0_7 = arith.constant 0 : index
    %8 = vector.load %arg4[%c0_6, %c0_7] : memref<128x32xf32, #tpu.memory_space<vmem>>, vector<128x32xf32>
    %cst_8 = arith.constant dense<0.000000e+00> : vector<8x32xf32>
    %9 = tpu.matmul %7, %8, %cst_8 {dimension_numbers = #tpu.dot_dimension_numbers<[1], [0], [0], [1], [0, 0, 1, 1], [], []>} : vector<8x128xf32>, vector<128x32xf32>, vector<8x32xf32> -> vector<8x32xf32>
    %10 = arith.addf %0, %9 : vector<8x32xf32>
    %c0_9 = arith.constant 0 : index
    %c0_10 = arith.constant 0 : index
    %11 = vector.load %arg5[%c0_9, %c0_10] : memref<1x32xf32, #tpu.memory_space<vmem>>, vector<1x32xf32>
    %12 = vector.broadcast %11 : vector<1x32xf32> to vector<8x32xf32>
    %13 = arith.addf %10, %12 : vector<8x32xf32>
    %cst_11 = arith.constant dense<0.000000e+00> : vector<8xf32>
    %14 = vector.multi_reduction <add>, %13, %cst_11 [1] : vector<8x32xf32> to vector<8xf32>
    %15 = vector.shape_cast %14 : vector<8xf32> to vector<8x1xf32>
    %cst_12 = arith.constant 3.125000e-02 : f32
    %16 = vector.broadcast %cst_12 : f32 to vector<8x1xf32>
    %17 = arith.mulf %15, %16 : vector<8x1xf32>
    %18 = vector.broadcast %17 : vector<8x1xf32> to vector<8x32xf32>
    %19 = arith.subf %13, %18 : vector<8x32xf32>
    %20 = arith.mulf %19, %19 : vector<8x32xf32>
    %cst_13 = arith.constant dense<0.000000e+00> : vector<8xf32>
    %21 = vector.multi_reduction <add>, %20, %cst_13 [1] : vector<8x32xf32> to vector<8xf32>
    %22 = vector.shape_cast %21 : vector<8xf32> to vector<8x1xf32>
    %cst_14 = arith.constant 3.125000e-02 : f32
    %23 = vector.broadcast %cst_14 : f32 to vector<8x1xf32>
    %24 = arith.mulf %22, %23 : vector<8x1xf32>
    %cst_15 = arith.constant 9.99999997E-7 : f32
    %25 = vector.broadcast %cst_15 : f32 to vector<8x1xf32>
    %26 = arith.addf %24, %25 : vector<8x1xf32>
    %27 = math.rsqrt %26 : vector<8x1xf32>
    %28 = vector.broadcast %27 : vector<8x1xf32> to vector<8x32xf32>
    %29 = arith.mulf %19, %28 : vector<8x32xf32>
    %c0_16 = arith.constant 0 : index
    %c0_17 = arith.constant 0 : index
    %30 = vector.load %arg6[%c0_16, %c0_17] : memref<1x32xf32, #tpu.memory_space<vmem>>, vector<1x32xf32>
    %31 = vector.broadcast %30 : vector<1x32xf32> to vector<8x32xf32>
    %32 = arith.mulf %29, %31 : vector<8x32xf32>
    %c0_18 = arith.constant 0 : index
    %c0_19 = arith.constant 0 : index
    %33 = vector.load %arg7[%c0_18, %c0_19] : memref<1x32xf32, #tpu.memory_space<vmem>>, vector<1x32xf32>
    %34 = vector.broadcast %33 : vector<1x32xf32> to vector<8x32xf32>
    %35 = arith.addf %32, %34 : vector<8x32xf32>
    %c0_20 = arith.constant 0 : index
    %c0_21 = arith.constant 0 : index
    %36 = vector.load %arg8[%c0_20, %c0_21] : memref<8x32xf32, #tpu.memory_space<vmem>>, vector<8x32xf32>
    tpu.vector_store %arg8[%c0_20, %c0_21], %35 {strides = array<i32>} : memref<8x32xf32, #tpu.memory_space<vmem>>, vector<8x32xf32>,
    return
  }
  func.func @transform_0(%arg0: i32) -> (i32, i32) {
    %c0_i32 = arith.constant 0 : i32
    %c0_i32_0 = arith.constant 0 : i32
    return %arg0, %c0_i32 : i32, i32
  }
  func.func @transform_1(%arg0: i32) -> (i32, i32) {
    %c0_i32 = arith.constant 0 : i32
    %c0_i32_0 = arith.constant 0 : i32
    %c0_i32_1 = arith.constant 0 : i32
    return %c0_i32, %c0_i32_0 : i32, i32
  }
  func.func @transform_2(%arg0: i32) -> (i32, i32) {
    %c0_i32 = arith.constant 0 : i32
    %c0_i32_0 = arith.constant 0 : i32
    %c0_i32_1 = arith.constant 0 : i32
    return %c0_i32, %c0_i32_0 : i32, i32
  }
  func.func @transform_3(%arg0: i32) -> (i32, i32) {
    %c0_i32 = arith.constant 0 : i32
    %c0_i32_0 = arith.constant 0 : i32
    %c0_i32_1 = arith.constant 0 : i32
    return %c0_i32, %c0_i32_0 : i32, i32
  }
  func.func @transform_4(%arg0: i32) -> (i32, i32) {
    %c0_i32 = arith.constant 0 : i32
    %c0_i32_0 = arith.constant 0 : i32
    %c0_i32_1 = arith.constant 0 : i32
    return %c0_i32, %c0_i32_0 : i32, i32
  }
  func.func @transform_5(%arg0: i32) -> (i32, i32) {
    %c0_i32 = arith.constant 0 : i32
    %c0_i32_0 = arith.constant 0 : i32
    %c0_i32_1 = arith.constant 0 : i32
    return %c0_i32, %c0_i32_0 : i32, i32
  }
  func.func @transform_6(%arg0: i32) -> (i32, i32) {
    %c0_i32 = arith.constant 0 : i32
    %c0_i32_0 = arith.constant 0 : i32
    %c0_i32_1 = arith.constant 0 : i32
    return %c0_i32, %c0_i32_0 : i32, i32
  }
  func.func @transform_7(%arg0: i32) -> (i32, i32) {
    %c0_i32 = arith.constant 0 : i32
    %c0_i32_0 = arith.constant 0 : i32
    return %arg0, %c0_i32 : i32, i32
  }
}

</mosaic_0001>

<llo_original>
// kernel: tpu_custom_call.1
$region0: #{tpu_custom_call.1}
  #allocation0 [shape = 'u32[]', space=smem, size = 0x4, offset = 0x4, fixed_abs, tag = 'smem constant byte address 0x4 - core index']
  #allocation1 [shape = 'u32[72,128]{1,0:T(1,128)}', space=vmem, size = 0x9000, scoped, tag = 'internal scratch']
  %s0 = inlined_call_operand.vmem [shape: f32[14,32], index: 0, kind: input, shape index: {}]
  %s1 = inlined_call_operand.vmem [shape: f32[32,128], index: 1, kind: input, shape index: {}]
  %s2 = inlined_call_operand.vmem [shape: f32[1,128], index: 2, kind: input, shape index: {}]
  %s3 = inlined_call_operand.vmem [shape: f32[128,32], index: 3, kind: input, shape index: {}]
  %s4 = inlined_call_operand.vmem [shape: f32[1,32], index: 4, kind: input, shape index: {}]
  %s5 = inlined_call_operand.vmem [shape: f32[1,32], index: 5, kind: input, shape index: {}]
  %s6 = inlined_call_operand.vmem [shape: f32[1,32], index: 6, kind: input, shape index: {}]
  %s7 = inlined_call_operand.hbm [shape: f32[14,32], index: 7, kind: output, shape index: {}]
  %s8 = sld [smem:[#allocation0]]
  $region61: #{tpu_custom_call.1} parent=0
    _
  %s10 = ssub.s32 1, %s8
  %s11 = scalar_select 0, %s10, %s8
  $region1: #{tpu_custom_call.1} parent=0
    #allocation2 [shape = 'u8[8192]{0}', space=vmem, size = 0x2000, scoped, tag = 'output window, operand 0']
    #allocation3 [shape = 's32[2]{0}', space=sflag, size = 0x8, scoped, tag = 'scoped memory for tpu_custom_call.1']
    %12 = vsyncpa [#allocation3], 0
    %s13 = scalar_lea.sflag [#allocation3], 1
    %14 = vsyncpa %s13, 0
    loop: start=0, step=1, limit=4
    $region2: #{tpu_custom_call.1} parent=1 // loop_pre_header
      _
    $region3: #{tpu_custom_call.1} parent=1 // loop_header
      %s16 = sphi 0, %s20
      %p17 = scmp.ge.s32.totalorder %s16, 4
      %s26 = sphi 0, %s28
      %s29 = sphi 0, %s26
      %s30 = sphi 0, %s29
      %s46 = sphi 0, %s30
      %s50 = sphi 0, %s50
      %s52 = sphi 0, %s50
      %s53 = sphi 0, %s52
      %s67 = sphi 0, %s53
      %s71 = sphi 0, %s71
      %s73 = sphi 0, %s71
      %s74 = sphi 0, %s73
      %s88 = sphi 0, %s74
      %s92 = sphi 0, %s92
      %s94 = sphi 0, %s92
      %s95 = sphi 0, %s94
      %s109 = sphi 0, %s95
      %s113 = sphi 0, %s113
      %s115 = sphi 0, %s113
      %s116 = sphi 0, %s115
      %s130 = sphi 0, %s116
      %s134 = sphi 0, %s134
      %s136 = sphi 0, %s134
      %s137 = sphi 0, %s136
      %s151 = sphi 0, %s137
      %s155 = sphi 0, %s155
      %s157 = sphi 0, %s155
      %s158 = sphi 0, %s157
      %s172 = sphi 0, %s158
      %s178 = sphi 0, %s180
      %s181 = sphi 0, %s178
      %s182 = sphi 0, %s181
      %s198 = sphi 0, %s182
    $region4: #{tpu_custom_call.1} parent=1 // loop_header_branch
      %19 = sbr.rel (%p17) target = $region8
    $region5: #{tpu_custom_call.1} parent=1 // loop_body
      %s21 = ssub.s32 %s16, 1
      %s22 = ssub.s32 %s16, 2
      %s23 = sadd.s32 %s16, 1
      %s24 = ssub.s32 %s16, %s23
      %p25 = scmp.eq.s32.totalorder %s24, 0
      %s27 = sadd.s32 %s26, 1
      %s28 = scalar_select %p25, %s26, %s27
      %p31 = pneg %p25
      %p32 = scmp.eq.s32.totalorder %s16, 1
      %p33 = por %p31, %p32
      %p34 = scmp.ne.s32.totalorder %s26, %s29
      %p35 = scmp.eq.s32.totalorder %s16, 0
      %p36 = por %p34, %p35
      %p37 = scmp.ne.s32.totalorder %s26, %s29
      %p38 = scmp.eq.s32.totalorder %s21, 1
      %p39 = por %p37, %p38
      %p40 = scmp.ne.s32.totalorder %s29, %s30
      %p41 = scmp.eq.s32.totalorder %s21, 0
      %p42 = por %p40, %p41
      %p43 = scmp.ne.s32.totalorder %s29, %s30
      %p44 = scmp.eq.s32.totalorder %s22, 1
      %p45 = por %p43, %p44
      %p47 = scmp.ne.s32.totalorder %s30, %s46
      %p48 = scmp.eq.s32.totalorder %s22, 0
      %p49 = por %p47, %p48
      %s51 = sadd.s32 %s50, 1
      %p54 = scmp.eq.s32.totalorder %s16, 1
      %p55 = scmp.ne.s32.totalorder %s50, %s52
      %p56 = scmp.eq.s32.totalorder %s16, 0
      %p57 = por %p55, %p56
      %p58 = scmp.ne.s32.totalorder %s50, %s52
      %p59 = scmp.eq.s32.totalorder %s21, 1
      %p60 = por %p58, %p59
      %p61 = scmp.ne.s32.totalorder %s52, %s53
      %p62 = scmp.eq.s32.totalorder %s21, 0
      %p63 = por %p61, %p62
      %p64 = scmp.ne.s32.totalorder %s52, %s53
      %p65 = scmp.eq.s32.totalorder %s22, 1
      %p66 = por %p64, %p65
      %p68 = scmp.ne.s32.totalorder %s53, %s67
      %p69 = scmp.eq.s32.totalorder %s22, 0
      %p70 = por %p68, %p69
      %s72 = sadd.s32 %s71, 1
      %p75 = scmp.eq.s32.totalorder %s16, 1
      %p76 = scmp.ne.s32.totalorder %s71, %s73
      %p77 = scmp.eq.s32.totalorder %s16, 0
      %p78 = por %p76, %p77
      %p79 = scmp.ne.s32.totalorder %s71, %s73
      %p80 = scmp.eq.s32.totalorder %s21, 1
      %p81 = por %p79, %p80
      %p82 = scmp.ne.s32.totalorder %s73, %s74
      %p83 = scmp.eq.s32.totalorder %s21, 0
      %p84 = por %p82, %p83
      %p85 = scmp.ne.s32.totalorder %s73, %s74
      %p86 = scmp.eq.s32.totalorder %s22, 1
      %p87 = por %p85, %p86
      %p89 = scmp.ne.s32.totalorder %s74, %s88
      %p90 = scmp.eq.s32.totalorder %s22, 0
      %p91 = por %p89, %p90
      %s93 = sadd.s32 %s92, 1
      %p96 = scmp.eq.s32.totalorder %s16, 1
      %p97 = scmp.ne.s32.totalorder %s92, %s94
      %p98 = scmp.eq.s32.totalorder %s16, 0
      %p99 = por %p97, %p98
      %p100 = scmp.ne.s32.totalorder %s92, %s94
      %p101 = scmp.eq.s32.totalorder %s21, 1
      %p102 = por %p100, %p101
      %p103 = scmp.ne.s32.totalorder %s94, %s95
      %p104 = scmp.eq.s32.totalorder %s21, 0
      %p105 = por %p103, %p104
      %p106 = scmp.ne.s32.totalorder %s94, %s95
      %p107 = scmp.eq.s32.totalorder %s22, 1
      %p108 = por %p106, %p107
      %p110 = scmp.ne.s32.totalorder %s95, %s109
      %p111 = scmp.eq.s32.totalorder %s22, 0
      %p112 = por %p110, %p111
      %s114 = sadd.s32 %s113, 1
      %p117 = scmp.eq.s32.totalorder %s16, 1
      %p118 = scmp.ne.s32.totalorder %s113, %s115
      %p119 = scmp.eq.s32.totalorder %s16, 0
      %p120 = por %p118, %p119
      %p121 = scmp.ne.s32.totalorder %s113, %s115
      %p122 = scmp.eq.s32.totalorder %s21, 1
      %p123 = por %p121, %p122
      %p124 = scmp.ne.s32.totalorder %s115, %s116
      %p125 = scmp.eq.s32.totalorder %s21, 0
      %p126 = por %p124, %p125
      %p127 = scmp.ne.s32.totalorder %s115, %s116
      %p128 = scmp.eq.s32.totalorder %s22, 1
      %p129 = por %p127, %p128
      %p131 = scmp.ne.s32.totalorder %s116, %s130
      %p132 = scmp.eq.s32.totalorder %s22, 0
      %p133 = por %p131, %p132
      %s135 = sadd.s32 %s134, 1
      %p138 = scmp.eq.s32.totalorder %s16, 1
      %p139 = scmp.ne.s32.totalorder %s134, %s136
      %p140 = scmp.eq.s32.totalorder %s16, 0
      %p141 = por %p139, %p140
      %p142 = scmp.ne.s32.totalorder %s134, %s136
      %p143 = scmp.eq.s32.totalorder %s21, 1
      %p144 = por %p142, %p143
      %p145 = scmp.ne.s32.totalorder %s136, %s137
      %p146 = scmp.eq.s32.totalorder %s21, 0
      %p147 = por %p145, %p146
      %p148 = scmp.ne.s32.totalorder %s136, %s137
      %p149 = scmp.eq.s32.totalorder %s22, 1
      %p150 = por %p148, %p149
      %p152 = scmp.ne.s32.totalorder %s137, %s151
      %p153 = scmp.eq.s32.totalorder %s22, 0
      %p154 = por %p152, %p153
      %s156 = sadd.s32 %s155, 1
      %p159 = scmp.eq.s32.totalorder %s16, 1
      %p160 = scmp.ne.s32.totalorder %s155, %s157
      %p161 = scmp.eq.s32.totalorder %s16, 0
      %p162 = por %p160, %p161
      %p163 = scmp.ne.s32.totalorder %s155, %s157
      %p164 = scmp.eq.s32.totalorder %s21, 1
      %p165 = por %p163, %p164
      %p166 = scmp.ne.s32.totalorder %s157, %s158
      %p167 = scmp.eq.s32.totalorder %s21, 0
      %p168 = por %p166, %p167
      %p169 = scmp.ne.s32.totalorder %s157, %s158
      %p170 = scmp.eq.s32.totalorder %s22, 1
      %p171 = por %p169, %p170
      %p173 = scmp.ne.s32.totalorder %s158, %s172
      %p174 = scmp.eq.s32.totalorder %s22, 0
      %p175 = por %p173, %p174
      %s176 = ssub.s32 %s16, %s23
      %p177 = scmp.eq.s32.totalorder %s176, 0
      %s179 = sadd.s32 %s178, 1
      %s180 = scalar_select %p177, %s178, %s179
      %p183 = pneg %p177
      %p184 = scmp.eq.s32.totalorder %s16, 1
      %p185 = por %p183, %p184
      %p186 = scmp.ne.s32.totalorder %s178, %s181
      %p187 = scmp.eq.s32.totalorder %s16, 0
      %p188 = por %p186, %p187
      %p189 = scmp.ne.s32.totalorder %s178, %s181
      %p190 = scmp.eq.s32.totalorder %s21, 1
      %p191 = por %p189, %p190
      %p192 = scmp.ne.s32.totalorder %s181, %s182
      %p193 = scmp.eq.s32.totalorder %s21, 0
      %p194 = por %p192, %p193
      %p195 = scmp.ne.s32.totalorder %s181, %s182
      %p196 = scmp.eq.s32.totalorder %s22, 1
      %p197 = por %p195, %p196
      %p199 = scmp.ne.s32.totalorder %s182, %s198
      %p200 = scmp.eq.s32.totalorder %s22, 0
      %p201 = por %p199, %p200
      %p202 = scmp.le.s32.totalorder 1, %s16
      %p203 = scmp.lt.s32.totalorder %s16, 3
      %p204 = pnand %p202, %p203
      %p205 = pneg %p204
      // Predicated region
      $region9: #{tpu_custom_call.1} parent=5 // pred_check
        _
      $region10: #{tpu_custom_call.1} parent=5 // pred_check_branch
        %207 = sbr.rel (%p204) target = $region12
      $region11: #{tpu_custom_call.1} parent=5 // pred_region
        %s208 = ssub.s32 %s16, 1
        // Predicated region
        $region13: #{tpu_custom_call.1} parent=11 // pred_check
          %p209 = pneg %p63
        $region14: #{tpu_custom_call.1} parent=11 // pred_check_branch
          %211 = sbr.rel (%p209) target = $region16
        $region15: #{tpu_custom_call.1} parent=11 // pred_region
          _
        $region16: #{tpu_custom_call.1} parent=11 // pred_fallthru
          _
        // Predicated region
        $region17: #{tpu_custom_call.1} parent=11 // pred_check
          %p212 = pneg %p84
        $region18: #{tpu_custom_call.1} parent=11 // pred_check_branch
          %214 = sbr.rel (%p212) target = $region20
        $region19: #{tpu_custom_call.1} parent=11 // pred_region
          _
        $region20: #{tpu_custom_call.1} parent=11 // pred_fallthru
          _
        // Predicated region
        $region21: #{tpu_custom_call.1} parent=11 // pred_check
          %p215 = pneg %p105
        $region22: #{tpu_custom_call.1} parent=11 // pred_check_branch
          %217 = sbr.rel (%p215) target = $region24
        $region23: #{tpu_custom_call.1} parent=11 // pred_region
          _
        $region24: #{tpu_custom_call.1} parent=11 // pred_fallthru
          _
        // Predicated region
        $region25: #{tpu_custom_call.1} parent=11 // pred_check
          %p218 = pneg %p126
        $region26: #{tpu_custom_call.1} parent=11 // pred_check_branch
          %220 = sbr.rel (%p218) target = $region28
        $region27: #{tpu_custom_call.1} parent=11 // pred_region
          _
        $region28: #{tpu_custom_call.1} parent=11 // pred_fallthru
          _
        // Predicated region
        $region29: #{tpu_custom_call.1} parent=11 // pred_check
          %p221 = pneg %p147
        $region30: #{tpu_custom_call.1} parent=11 // pred_check_branch
          %223 = sbr.rel (%p221) target = $region32
        $region31: #{tpu_custom_call.1} parent=11 // pred_region
          _
        $region32: #{tpu_custom_call.1} parent=11 // pred_fallthru
          _
        // Predicated region
        $region33: #{tpu_custom_call.1} parent=11 // pred_check
          %p224 = pneg %p168
        $region34: #{tpu_custom_call.1} parent=11 // pred_check_branch
          %226 = sbr.rel (%p224) target = $region36
        $region35: #{tpu_custom_call.1} parent=11 // pred_region
          _
        $region36: #{tpu_custom_call.1} parent=11 // pred_fallthru
          _
      $region12: #{tpu_custom_call.1} parent=5 // pred_fallthru
        _
      %p227 = scmp.lt.s32.totalorder %s16, 2
      // Predicated region
      $region37: #{tpu_custom_call.1} parent=5 // pred_check
        %p228 = pneg %p227
      $region38: #{tpu_custom_call.1} parent=5 // pred_check_branch
        %230 = sbr.rel (%p228) target = $region40
      $region39: #{tpu_custom_call.1} parent=5 // pred_region
        // Predicated region
        $region41: #{tpu_custom_call.1} parent=39 // pred_check
          %p231 = pneg %p36
        $region42: #{tpu_custom_call.1} parent=39 // pred_check_branch
          %233 = sbr.rel (%p231) target = $region44
        $region43: #{tpu_custom_call.1} parent=39 // pred_region
          %p234 = scmp.lt.s32.totalorder %s16, 1
          %s235 = scalar_select %p234, %s16, 1
          %s236 = smul.addr %s235, 8
          %s237 = scalar_lea.vmem %s0, %s236
        $region44: #{tpu_custom_call.1} parent=39 // pred_fallthru
          _
      $region40: #{tpu_custom_call.1} parent=5 // pred_fallthru
        _
      %p238 = scmp.le.s32.totalorder 1, %s16
      %p239 = scmp.lt.s32.totalorder %s16, 3
      %p240 = pnand %p238, %p239
      %p241 = pneg %p240
      // Predicated region
      $region45: #{tpu_custom_call.1} parent=5 // pred_check
        _
      $region46: #{tpu_custom_call.1} parent=5 // pred_check_branch
        %243 = sbr.rel (%p240) target = $region48
      $region47: #{tpu_custom_call.1} parent=5 // pred_region
        %s244 = ssub.s32 %s16, 1
        %p245 = scmp.lt.s32.totalorder %s21, 1
        %s246 = scalar_select %p245, %s21, 1
        %s247 = smul.addr %s246, 8
        %s248 = scalar_lea.vmem %s0, %s247
        %p249 = pneg %p42
        %p250 = pneg %p39
        %p251 = pneg %p63
        %p252 = pneg %p60
        %p253 = pneg %p84
        %p254 = pneg %p81
        %p255 = pneg %p105
        %p256 = pneg %p102
        %p257 = pneg %p126
        %p258 = pneg %p123
        %p259 = pneg %p147
        %p260 = pneg %p144
        %p261 = pneg %p168
        %p262 = pneg %p165
        %p263 = pneg %p194
        %p264 = pneg %p191
        %s265 = sand.u32 %s181, 1
        %s266 = scalar_lea.sflag [#allocation3], %s265
        %s267 = sand.u32 %s181, 1
        %s268 = smul.addr %s267, 8
        %s269 = scalar_lea.vmem [#allocation2], %s268
        %p270 = scmp.lt.s32.totalorder %s21, 1
        %s271 = scalar_select %p270, %s21, 1
        %s272 = smul.addr %s271, 8
        %s273 = scalar_lea.vmem %s0, %s272
        %v274 = vld [vmem:[%s273] sm:$0xff]
        %v275 = vld [vmem:[%s1] sm:$0xff]
        %v276 = vld [vmem:[%s1 + $0x8] sm:$0xff]
        %v277 = vld [vmem:[%s1 + $0x10] sm:$0xff]
        %v278 = vld [vmem:[%s1 + $0x18] sm:$0xff]
        %v279 = vld [vmem:[%s2] sm:$0x1]
        %v281 = vperm.slane %v279, 0
        %vm283 = vcmask 261120
        %v285 = vsel %vm283, %v274, 0
        %287 = vmatpush.msra.mxu0 0.0
        %288 = vmatpush.msra.mxu0 0.0
        %289 = vmatpush.msra.mxu0 0.0
        %290 = vmatpush.msra.mxu0 0.0
        %291 = vmatpush.msra.mxu0 0.0
        %292 = vmatpush.msra.mxu0 0.0
        %293 = vmatpush.msra.mxu0 0.0
        %294 = vmatpush.msra.mxu0 0.0
        %295 = vmatpush.msra.mxu0 0.0
        %296 = vmatpush.msra.mxu0 0.0
        %297 = vmatpush.msra.mxu0 0.0
        %298 = vmatpush.msra.mxu0 0.0
        %299 = vmatpush.msra.mxu0 %v278
        %300 = vmatpush.msra.mxu0 %v277
        %301 = vmatpush.msra.mxu0 %v276
        %302 = vmatpush.msra.mxu0 %v275
        %303 = vmatmul.f32.gmra.mxu0 %v285
        %v304 = vpop.f32.mrf.mxu0
        %v305 = vadd.f32 %v281, %v304
        %306 = vdwg.mxu0
        %v307 = vmax.f32 %v305, 0.0
        %v308 = vld [vmem:[%s3] sm:$0xff]
        %v309 = vld [vmem:[%s3 + $0x8] sm:$0xff]
        %v310 = vld [vmem:[%s3 + $0x10] sm:$0xff]
        %v311 = vld [vmem:[%s3 + $0x18] sm:$0xff]
        %v312 = vld [vmem:[%s3 + $0x20] sm:$0xff]
        %v313 = vld [vmem:[%s3 + $0x28] sm:$0xff]
        %v314 = vld [vmem:[%s3 + $0x30] sm:$0xff]
        %v315 = vld [vmem:[%s3 + $0x38] sm:$0xff]
        %v316 = vld [vmem:[%s3 + $0x40] sm:$0xff]
        %v317 = vld [vmem:[%s3 + $0x48] sm:$0xff]
        %v318 = vld [vmem:[%s3 + $0x50] sm:$0xff]
        %v319 = vld [vmem:[%s3 + $0x58] sm:$0xff]
        %v320 = vld [vmem:[%s3 + $0x60] sm:$0xff]
        %v321 = vld [vmem:[%s3 + $0x68] sm:$0xff]
        %v322 = vld [vmem:[%s3 + $0x70] sm:$0xff]
        %v323 = vld [vmem:[%s3 + $0x78] sm:$0xff]
        %324 = vmatpush.msra.mxu0 %v323
        %325 = vmatpush.msra.mxu0 %v322
        %326 = vmatpush.msra.mxu0 %v321
        %327 = vmatpush.msra.mxu0 %v320
        %328 = vmatpush.msra.mxu0 %v319
        %329 = vmatpush.msra.mxu0 %v318
        %330 = vmatpush.msra.mxu0 %v317
        %331 = vmatpush.msra.mxu0 %v316
        %332 = vmatpush.msra.mxu0 %v315
        %333 = vmatpush.msra.mxu0 %v314
        %334 = vmatpush.msra.mxu0 %v313
        %335 = vmatpush.msra.mxu0 %v312
        %336 = vmatpush.msra.mxu0 %v311
        %337 = vmatpush.msra.mxu0 %v310
        %338 = vmatpush.msra.mxu0 %v309
        %339 = vmatpush.msra.mxu0 %v308
        %340 = vmatmul.f32.gmra.mxu0 %v307
        %v341 = vpop.f32.mrf.mxu0
        %v342 = vadd.f32 0.0, %v341
        %343 = vdwg.mxu0
        %v344 = vadd.f32 %v274, %v342
        %v345 = vld [vmem:[%s4] sm:$0x1]
        %v347 = vperm.slane %v345, 0
        %v349 = vadd.f32 %v344, %v347
        %v350 = vsel %vm283, %v349, 0.0
        %351 = vadd.xlane.f32.xlu0 %v350
        %v352 = vpop.xlane.xlu0 %351
        %v353 = vmul.f32 %v352, 0.03125
        %v354 = vsub.f32 %v349, %v353
        %v355 = vmul.f32 %v354, %v354
        %v356 = vsel %vm283, %v355, 0.0
        %357 = vadd.xlane.f32.xlu0 %v356
        %v358 = vpop.xlane.xlu0 %357
        %v359 = vmul.f32 %v358, 0.03125
        %v360 = vadd.f32 %v359, 1e-06
        %v361 = vrsqrt.pop %v360
        %v362 = vmul.f32 %v361, %v360
        %v363 = vmul.f32 %v362, %v361
        %v364 = vmul.f32 0.5, %v363
        %v365 = vsub.f32 1.5, %v364
        %v366 = vmul.f32 %v361, %v365
        %vm367 = vweird.f32 %v360
        %vm368 = vweird.f32 %v361
        %vm369 = vmor %vm367, %vm368
        %v370 = vsel %vm369, %v361, %v366
        %v371 = vmul.f32 %v354, %v370
        %v372 = vld [vmem:[%s5] sm:$0x1]
        %v374 = vperm.slane %v372, 0
        %v376 = vmul.f32 %v371, %v374
        %v377 = vld [vmem:[%s6] sm:$0x1]
        %v379 = vperm.slane %v377, 0
        %v381 = vadd.f32 %v376, %v379
        %382 = vst.msk [vmem:[%s269] sm:$0xff] %vm283, %v381
        %s383 = sand.u32 %s181, 1
        %s384 = scalar_lea.sflag [#allocation3], %s383
        %s385 = sand.u32 %s181, 1
        %s386 = smul.addr %s385, 8
        %s387 = scalar_lea.vmem [#allocation2], %s386
        // Predicated region
        $region49: #{tpu_custom_call.1} parent=47 // pred_check
          %p388 = pneg %p191
        $region50: #{tpu_custom_call.1} parent=47 // pred_check_branch
          %390 = sbr.rel (%p388) target = $region52
        $region51: #{tpu_custom_call.1} parent=47 // pred_region
          %392 = vsyncadd %s384, 0
          %s393 = smul.addr %s21, 8
          %s394 = scalar_lea.hbm %s7, %s393
          %s396 = sshll.u32 %s387, 4
          %s397 = int_to_ptr.vmem [resolvable:$true] %s396
          %s398 = sshll.u32 %s394, 4
          %s399 = int_to_ptr.hbm [resolvable:$true] %s398
          %401 = dma.vmem_to_hbm [thread:$0]  %s397, 128, %s399, %s384
        $region52: #{tpu_custom_call.1} parent=47 // pred_fallthru
          _
      $region48: #{tpu_custom_call.1} parent=5 // pred_fallthru
        _
      %p402 = scmp.le.s32.totalorder 2, %s16
      // Predicated region
      $region53: #{tpu_custom_call.1} parent=5 // pred_check
        %p403 = pneg %p402
      $region54: #{tpu_custom_call.1} parent=5 // pred_check_branch
        %405 = sbr.rel (%p403) target = $region56
      $region55: #{tpu_custom_call.1} parent=5 // pred_region
        %s406 = ssub.s32 %s16, 2
        // Predicated region
        $region57: #{tpu_custom_call.1} parent=55 // pred_check
          %p407 = pneg %p197
        $region58: #{tpu_custom_call.1} parent=55 // pred_check_branch
          %409 = sbr.rel (%p407) target = $region60
        $region59: #{tpu_custom_call.1} parent=55 // pred_region
          %s410 = sand.u32 %s182, 1
          %s411 = scalar_lea.sflag [#allocation3], %s410
          %s412 = sand.u32 %s182, 1
          %s413 = smul.addr %s412, 8
          %s414 = scalar_lea.vmem [#allocation2], %s413
          %416 = dma.done %s411, 128
        $region60: #{tpu_custom_call.1} parent=55 // pred_fallthru
          _
      $region56: #{tpu_custom_call.1} parent=5 // pred_fallthru
        _
    $region6: #{tpu_custom_call.1} parent=1 // loop_footer
      %s20 = sadd.s32 1, %s16
    $region7: #{tpu_custom_call.1} parent=1 // loop_footer_branch
      %15 = sbr.rel target = $region3
    $region8: #{tpu_custom_call.1} parent=1 // loop_exit
      _
    %417 = vsyncpa [#allocation3], 1
    %s418 = scalar_lea.sflag [#allocation3], 1
    %419 = vsyncpa %s418, 1

</llo_original>
